<compile_context>
chip_gen: v5e
topology: v5e:2x2
jax: 0.10.0
libtpu: 0.0.40
codegen_flags: <defaults>
</compile_context>

<pallas_src>
import math

import jax
import jax.numpy as jnp
from jax.experimental import pallas as pl
from jax.experimental.pallas import tpu as pltpu


def _round_up(x: int, m: int) -> int:
    return ((x + m - 1) // m) * m


def _cdiv(a: int, b: int) -> int:
    return -(-a // b)


def _pick_tiling(M: int, tile_m):
    """Per-generation row-tile size and VMEM limit (f32 ingest, double-buffered)."""
    try:
        vmem_cap = int(getattr(pltpu.get_tpu_info(), "vmem_capacity_bytes",
                               64 * 1024 * 1024))
    except Exception:
        vmem_cap = 64 * 1024 * 1024
    if vmem_cap >= 96 * 1024 * 1024:            # v5e / v6e: 128 MiB VMEM
        default_tile_m, vmem_limit = 4096, 96 * 1024 * 1024
    else:                                        # v7x: 64 MiB per TensorCore
        default_tile_m, vmem_limit = 2048, 48 * 1024 * 1024

    if tile_m is None:
        tile_m = default_tile_m
    tile_m = max(8, (int(tile_m) // 8) * 8)      # f32 ingest -> multiple of 8 suffices
    if tile_m > M:
        tile_m = _round_up(M, 8)

    # Megacore balance (v7x): prefer an even number of row tiles when the tiles
    # stay large; harmless on single-TC v5e/v6e.
    n_tiles = _cdiv(M, tile_m)
    if n_tiles > 1 and n_tiles % 2 == 1:
        balanced = _round_up(_cdiv(M, n_tiles + 1), 8)
        if balanced >= 512:
            tile_m = balanced
    return tile_m, vmem_limit


def ensemble_head_kernel(h1_ref, h2_ref, w1_ref, w2_ref, b_ref, o_ref):
    # logits = h1 @ W1 + h2 @ W2 + b   (W1: (H1, Lp) bf16, W2: (H2, Lp) bf16,
    #                                   b: (1, Lp) f32)
    # Activations arrive in their native dtype (f32); cast to bf16 here, at the
    # VMEM->vreg boundary, so HBM only ever sees the original tensors once.
    h1 = h1_ref[...].astype(jnp.bfloat16)
    h2 = h2_ref[...].astype(jnp.bfloat16)
    acc = jnp.dot(h1, w1_ref[...], preferred_element_type=jnp.float32)
    acc = acc + jnp.dot(h2, w2_ref[...], preferred_element_type=jnp.float32)
    # Epilogue kept in f32 (bias add + cast); output lane dim is a dense 128.
    o_ref[...] = (acc + b_ref[...]).astype(o_ref.dtype)


def bert_ensemble_head(h1, h2, weight, bias, *, tile_m=None):
    """Fused concat + dropout(p=0) + Linear classifier.

    h1:     (B, S, H1) float32   last hidden states of bert_1
    h2:     (B, S, H2) float32   last hidden states of bert_2
    weight: (L, H1+H2) float32   nn.Linear layout (out x in)
    bias:   (L,)       float32
    returns logits (B, S, L) float32
    """
    B, S, H1 = h1.shape
    H2 = h2.shape[-1]
    L = weight.shape[0]
    M = B * S

    tile_m, vmem_limit = _pick_tiling(M, tile_m)
    L_pad = _round_up(max(L, 128), 128)          # lane-dense output stores

    # Activations: (B,S,H) -> (M,H) reshape only (free); NO wrapper cast, NO row pad.
    h1_2d = h1.reshape(M, H1)
    h2_2d = h2.reshape(M, H2)

    # Split + transpose classifier weight so no explicit concat is needed.
    # Weights are tiny and DMA'd once (constant index map), so the bf16 cast here
    # costs negligible HBM traffic and halves their resident VMEM footprint.
    w1 = weight[:, :H1].T.astype(jnp.bfloat16)   # (H1, L)
    w2 = weight[:, H1:].T.astype(jnp.bfloat16)   # (H2, L)
    b2d = bias.astype(jnp.float32)
    if L_pad != L:
        w1 = jnp.pad(w1, ((0, 0), (0, L_pad - L)))
        w2 = jnp.pad(w2, ((0, 0), (0, L_pad - L)))
        b2d = jnp.pad(b2d, (0, L_pad - L))
    b2d = b2d.reshape(1, L_pad)

    grid = (pl.cdiv(M, tile_m),)                 # ragged last block handled by Pallas

    logits_2d = pl.pallas_call(
        ensemble_head_kernel,
        out_shape=jax.ShapeDtypeStruct((M, L_pad), jnp.float32),
        grid_spec=pltpu.PrefetchScalarGridSpec(
            num_scalar_prefetch=0,
            grid=grid,
            in_specs=[
                pl.BlockSpec((tile_m, H1), lambda i: (i, 0)),
                pl.BlockSpec((tile_m, H2), lambda i: (i, 0)),
                # Constant-index blocks: fetched once, resident across the grid.
                pl.BlockSpec((H1, L_pad), lambda i: (0, 0)),
                pl.BlockSpec((H2, L_pad), lambda i: (0, 0)),
                pl.BlockSpec((1, L_pad), lambda i: (0, 0)),
            ],
            out_specs=pl.BlockSpec((tile_m, L_pad), lambda i: (i, 0)),
        ),
        compiler_params=pltpu.CompilerParams(
            dimension_semantics=("parallel",),   # row tiles independent (megacore)
            vmem_limit_bytes=vmem_limit,         # per-generation (48 MiB v7x / 96 MiB v5e,v6e)
        ),
    )(h1_2d, h2_2d, w1, w2, b2d)

    return logits_2d[:M, :L].reshape(B, S, L)


def init_classifier_params(key, in_features, out_features):
    """nn.Linear with xavier_uniform_ weight, zero bias (matches _init_classifier)."""
    bound = math.sqrt(6.0 / (in_features + out_features))
    weight = jax.random.uniform(
        key, (out_features, in_features), dtype=jnp.float32,
        minval=-bound, maxval=bound)
    bias = jnp.zeros((out_features,), dtype=jnp.float32)
    return weight, bias


def _matched_ref(h1, h2, weight, bias):
    """Plain-JAX reference with the same bf16 rounding of activations/weights."""
    h1b = h1.astype(jnp.bfloat16).astype(jnp.float32)
    h2b = h2.astype(jnp.bfloat16).astype(jnp.float32)
    wb = weight.astype(jnp.bfloat16).astype(jnp.float32)
    return jnp.concatenate([h1b, h2b], axis=-1) @ wb.T + bias


if __name__ == "__main__":
    key = jax.random.PRNGKey(0)
    k_h1, k_h2, k_w, k_h3, k_h4 = jax.random.split(key, 5)

    # Small, forward-consistent shapes.
    B, S = 2, 8           # batch, sequence length
    H1, H2 = 32, 32       # hidden sizes of bert_1 / bert_2
    L = 8                 # num_labels

    # Synthetic deterministic "last hidden states" of the two frozen BERTs.
    h1 = jax.random.normal(k_h1, (B, S, H1), dtype=jnp.float32)
    h2 = jax.random.normal(k_h2, (B, S, H2), dtype=jnp.float32)
    weight, bias = init_classifier_params(k_w, H1 + H2, L)

    # --- Case 1: tiny shapes, single row block. ---
    logits = jax.block_until_ready(bert_ensemble_head(h1, h2, weight, bias))
    ref = _matched_ref(h1, h2, weight, bias)
    ref_f32 = jnp.concatenate([h1, h2], axis=-1) @ weight.T + bias
    assert logits.shape == (B, S, L)
    assert jnp.allclose(logits, ref, atol=1e-4, rtol=1e-4)
    assert float(jnp.max(jnp.abs(logits - ref_f32))) < 0.1  # bf16 rounding only

    # --- Case 2: M not a multiple of the tile -> exercises the ragged last block
    #     (no explicit row padding; Pallas bounds reads / masks tail writes). ---
    B2, S2 = 3, 10        # M = 30 -> grid of 2 steps with tile_m=16, last block ragged
    h3 = jax.random.normal(k_h3, (B2, S2, H1), dtype=jnp.float32)
    h4 = jax.random.normal(k_h4, (B2, S2, H2), dtype=jnp.float32)
    logits2 = jax.block_until_ready(
        bert_ensemble_head(h3, h4, weight, bias, tile_m=16))
    ref2 = _matched_ref(h3, h4, weight, bias)
    assert logits2.shape == (B2, S2, L)
    assert jnp.allclose(logits2, ref2, atol=1e-4, rtol=1e-4)

    print("KERNEL_OK")
</pallas_src>

<mosaic_0001>
module attributes {stable_mosaic.version = 11 : i64} {
  func.func @ensemble_head_kernel(%arg0: i32, %arg1: memref<16x32xf32, #tpu.memory_space<vmem>>, %arg2: memref<16x32xf32, #tpu.memory_space<vmem>>, %arg3: memref<32x128xbf16, #tpu.memory_space<vmem>>, %arg4: memref<32x128xbf16, #tpu.memory_space<vmem>>, %arg5: memref<1x128xf32, #tpu.memory_space<vmem>>, %arg6: memref<16x128xf32, #tpu.memory_space<vmem>>) attributes {dimension_semantics = [#tpu.dimension_semantics<parallel>], iteration_bounds = array<i64: 1>, scalar_prefetch = 0 : i64, scratch_operands = 0 : i64, tpu.core_type = #tpu.core_type<tc>, window_params = [{transform_indices = @transform_0, window_bounds = array<i64: 16, 32>}, {transform_indices = @transform_1, window_bounds = array<i64: 16, 32>}, {pipeline_mode = #tpu.pipeline_mode<synchronous>, transform_indices = @transform_2, window_bounds = array<i64: 32, 128>}, {pipeline_mode = #tpu.pipeline_mode<synchronous>, transform_indices = @transform_3, window_bounds = array<i64: 32, 128>}, {pipeline_mode = #tpu.pipeline_mode<synchronous>, transform_indices = @transform_4, window_bounds = array<i64: 1, 128>}, {transform_indices = @transform_5, window_bounds = array<i64: 16, 128>}]} {
    %c0 = arith.constant 0 : index
    %c0_0 = arith.constant 0 : index
    %0 = vector.load %arg1[%c0, %c0_0] : memref<16x32xf32, #tpu.memory_space<vmem>>, vector<16x32xf32>
    %1 = arith.truncf %0 : vector<16x32xf32> to vector<16x32xbf16>
    %c0_1 = arith.constant 0 : index
    %c0_2 = arith.constant 0 : index
    %2 = vector.load %arg2[%c0_1, %c0_2] : memref<16x32xf32, #tpu.memory_space<vmem>>, vector<16x32xf32>
    %3 = arith.truncf %2 : vector<16x32xf32> to vector<16x32xbf16>
    %c0_3 = arith.constant 0 : index
    %c0_4 = arith.constant 0 : index
    %4 = vector.load %arg3[%c0_3, %c0_4] : memref<32x128xbf16, #tpu.memory_space<vmem>>, vector<32x128xbf16>
    %cst = arith.constant dense<0.000000e+00> : vector<16x128xf32>
    %5 = tpu.matmul %1, %4, %cst {dimension_numbers = #tpu.dot_dimension_numbers<[1], [0], [0], [1], [0, 0, 1, 1], [], []>} : vector<16x32xbf16>, vector<32x128xbf16>, vector<16x128xf32> -> vector<16x128xf32>
    %c0_5 = arith.constant 0 : index
    %c0_6 = arith.constant 0 : index
    %6 = vector.load %arg4[%c0_5, %c0_6] : memref<32x128xbf16, #tpu.memory_space<vmem>>, vector<32x128xbf16>
    %cst_7 = arith.constant dense<0.000000e+00> : vector<16x128xf32>
    %7 = tpu.matmul %3, %6, %cst_7 {dimension_numbers = #tpu.dot_dimension_numbers<[1], [0], [0], [1], [0, 0, 1, 1], [], []>} : vector<16x32xbf16>, vector<32x128xbf16>, vector<16x128xf32> -> vector<16x128xf32>
    %8 = arith.addf %5, %7 : vector<16x128xf32>
    %c0_8 = arith.constant 0 : index
    %c0_9 = arith.constant 0 : index
    %9 = vector.load %arg5[%c0_8, %c0_9] : memref<1x128xf32, #tpu.memory_space<vmem>>, vector<1x128xf32>
    %10 = vector.broadcast %9 : vector<1x128xf32> to vector<16x128xf32>
    %11 = arith.addf %8, %10 : vector<16x128xf32>
    %c0_10 = arith.constant 0 : index
    %c0_11 = arith.constant 0 : index
    %12 = vector.load %arg6[%c0_10, %c0_11] : memref<16x128xf32, #tpu.memory_space<vmem>>, vector<16x128xf32>
    tpu.vector_store %arg6[%c0_10, %c0_11], %11 {strides = array<i32>} : memref<16x128xf32, #tpu.memory_space<vmem>>, vector<16x128xf32>,
    return
  }
  func.func @transform_0(%arg0: i32) -> (i32, i32) {
    %c0_i32 = arith.constant 0 : i32
    %c0_i32_0 = arith.constant 0 : i32
    return %arg0, %c0_i32 : i32, i32
  }
  func.func @transform_1(%arg0: i32) -> (i32, i32) {
    %c0_i32 = arith.constant 0 : i32
    %c0_i32_0 = arith.constant 0 : i32
    return %arg0, %c0_i32 : i32, i32
  }
  func.func @transform_2(%arg0: i32) -> (i32, i32) {
    %c0_i32 = arith.constant 0 : i32
    %c0_i32_0 = arith.constant 0 : i32
    %c0_i32_1 = arith.constant 0 : i32
    return %c0_i32, %c0_i32_0 : i32, i32
  }
  func.func @transform_3(%arg0: i32) -> (i32, i32) {
    %c0_i32 = arith.constant 0 : i32
    %c0_i32_0 = arith.constant 0 : i32
    %c0_i32_1 = arith.constant 0 : i32
    return %c0_i32, %c0_i32_0 : i32, i32
  }
  func.func @transform_4(%arg0: i32) -> (i32, i32) {
    %c0_i32 = arith.constant 0 : i32
    %c0_i32_0 = arith.constant 0 : i32
    %c0_i32_1 = arith.constant 0 : i32
    return %c0_i32, %c0_i32_0 : i32, i32
  }
  func.func @transform_5(%arg0: i32) -> (i32, i32) {
    %c0_i32 = arith.constant 0 : i32
    %c0_i32_0 = arith.constant 0 : i32
    return %arg0, %c0_i32 : i32, i32
  }
}

</mosaic_0001>

<llo_original>
// kernel: tpu_custom_call.1
$region0: #{tpu_custom_call.1}
  #allocation0 [shape = 'u32[]', space=smem, size = 0x4, offset = 0x4, fixed_abs, tag = 'smem constant byte address 0x4 - core index']
  #allocation1 [shape = 'u32[72,128]{1,0:T(1,128)}', space=vmem, size = 0x9000, scoped, tag = 'internal scratch']
  %s0 = inlined_call_operand.hbm [shape: f32[16,32], index: 0, kind: input, shape index: {}]
  %s1 = inlined_call_operand.hbm [shape: f32[16,32], index: 1, kind: input, shape index: {}]
  %s2 = inlined_call_operand.hbm [shape: bf16[32,128], index: 2, kind: input, shape index: {}]
  %s3 = inlined_call_operand.hbm [shape: bf16[32,128], index: 3, kind: input, shape index: {}]
  %s4 = inlined_call_operand.vmem [shape: f32[1,128], index: 4, kind: input, shape index: {}]
  %s5 = inlined_call_operand.hbm [shape: f32[16,128], index: 5, kind: output, shape index: {}]
  %s6 = sld [smem:[#allocation0]]
  $region46: #{tpu_custom_call.1} parent=0
    _
  %s8 = ssub.s32 1, %s6
  %s9 = scalar_select 0, %s8, %s6
  $region1: #{tpu_custom_call.1} parent=0
    #allocation2 [shape = 'u8[8192]{0}', space=vmem, size = 0x2000, scoped, tag = 'input window, operand 0, single buffered']
    #allocation3 [shape = 's32[1]{0}', space=sflag, size = 0x4, scoped, tag = 'scoped memory for tpu_custom_call.1']
    #allocation4 [shape = 's32[1]{0}', space=sflag, size = 0x4, scoped, tag = 'scoped memory for tpu_custom_call.1']
    #allocation5 [shape = 'u8[8192]{0}', space=vmem, size = 0x2000, scoped, tag = 'input window, operand 1, single buffered']
    #allocation6 [shape = 's32[1]{0}', space=sflag, size = 0x4, scoped, tag = 'scoped memory for tpu_custom_call.1']
    #allocation7 [shape = 'u8[8192]{0}', space=vmem, size = 0x2000, scoped, tag = 'input window, operand 2, single buffered']
    #allocation8 [shape = 'u8[8192]{0}', space=vmem, size = 0x2000, scoped, tag = 'input window, operand 3, single buffered']
    #allocation9 [shape = 's32[1]{0}', space=sflag, size = 0x4, scoped, tag = 'scoped memory for tpu_custom_call.1']
    #allocation10 [shape = 'u8[8192]{0}', space=vmem, size = 0x2000, scoped, tag = 'output window, operand 0, single buffered']
    %10 = vsyncpa [#allocation3], 0
    %11 = vsyncpa [#allocation6], 0
    %12 = vsyncpa [#allocation9], 0
    %13 = vsyncpa [#allocation4], 0
    // Predicated region
    $region2: #{tpu_custom_call.1} parent=1 // pred_check
      _
    $region3: #{tpu_custom_call.1} parent=1 // pred_check_branch
      %15 = sbr.rel (0) target = $region5
    $region4: #{tpu_custom_call.1} parent=1 // pred_region
      %17 = vsyncadd [#allocation3], 0
      %s18 = sshll.u32 %s0, 4
      %s19 = int_to_ptr.hbm [resolvable:$true] %s18
      %s20 = sshll.u32 [#allocation2], 4
      %s21 = int_to_ptr.vmem [resolvable:$true] %s20
      %26 = dma.hbm_to_vmem [thread:$0]  %s19, 256, %s21, [#allocation3], 128, 128, 8
    $region5: #{tpu_custom_call.1} parent=1 // pred_fallthru
      _
    // Predicated region
    $region6: #{tpu_custom_call.1} parent=1 // pred_check
      _
    $region7: #{tpu_custom_call.1} parent=1 // pred_check_branch
      %28 = sbr.rel (0) target = $region9
    $region8: #{tpu_custom_call.1} parent=1 // pred_region
      %30 = vsyncadd [#allocation6], 0
      %s31 = sshll.u32 %s1, 4
      %s32 = int_to_ptr.hbm [resolvable:$true] %s31
      %s33 = sshll.u32 [#allocation5], 4
      %s34 = int_to_ptr.vmem [resolvable:$true] %s33
      %39 = dma.hbm_to_vmem [thread:$0]  %s32, 256, %s34, [#allocation6], 128, 128, 8
    $region9: #{tpu_custom_call.1} parent=1 // pred_fallthru
      _
    // Predicated region
    $region10: #{tpu_custom_call.1} parent=1 // pred_check
      _
    $region11: #{tpu_custom_call.1} parent=1 // pred_check_branch
      %41 = sbr.rel (0) target = $region13
    $region12: #{tpu_custom_call.1} parent=1 // pred_region
      %43 = vsyncadd [#allocation6], 0
      %s44 = sshll.u32 %s2, 4
      %s45 = int_to_ptr.hbm [resolvable:$true] %s44
      %s46 = sshll.u32 [#allocation7], 4
      %s47 = int_to_ptr.vmem [resolvable:$true] %s46
      %52 = dma.hbm_to_vmem [thread:$0]  %s45, 256, %s47, [#allocation6], 64, 64, 4
    $region13: #{tpu_custom_call.1} parent=1 // pred_fallthru
      _
    // Predicated region
    $region14: #{tpu_custom_call.1} parent=1 // pred_check
      _
    $region15: #{tpu_custom_call.1} parent=1 // pred_check_branch
      %54 = sbr.rel (0) target = $region17
    $region16: #{tpu_custom_call.1} parent=1 // pred_region
      %56 = vsyncadd [#allocation9], 0
      %s57 = sshll.u32 %s3, 4
      %s58 = int_to_ptr.hbm [resolvable:$true] %s57
      %s59 = sshll.u32 [#allocation8], 4
      %s60 = int_to_ptr.vmem [resolvable:$true] %s59
      %65 = dma.hbm_to_vmem [thread:$0]  %s58, 256, %s60, [#allocation9], 64, 64, 4
    $region17: #{tpu_custom_call.1} parent=1 // pred_fallthru
      _
    // Predicated region
    $region18: #{tpu_custom_call.1} parent=1 // pred_check
      _
    $region19: #{tpu_custom_call.1} parent=1 // pred_check_branch
      %67 = sbr.rel (0) target = $region21
    $region20: #{tpu_custom_call.1} parent=1 // pred_region
      _
    $region21: #{tpu_custom_call.1} parent=1 // pred_fallthru
      _
    // Predicated region
    $region22: #{tpu_custom_call.1} parent=1 // pred_check
      _
    $region23: #{tpu_custom_call.1} parent=1 // pred_check_branch
      %69 = sbr.rel (0) target = $region25
    $region24: #{tpu_custom_call.1} parent=1 // pred_region
      %71 = dma.done [#allocation3], 256
    $region25: #{tpu_custom_call.1} parent=1 // pred_fallthru
      _
    // Predicated region
    $region26: #{tpu_custom_call.1} parent=1 // pred_check
      _
    $region27: #{tpu_custom_call.1} parent=1 // pred_check_branch
      %73 = sbr.rel (0) target = $region29
    $region28: #{tpu_custom_call.1} parent=1 // pred_region
      %75 = dma.done [#allocation6], 256
    $region29: #{tpu_custom_call.1} parent=1 // pred_fallthru
      _
    // Predicated region
    $region30: #{tpu_custom_call.1} parent=1 // pred_check
      _
    $region31: #{tpu_custom_call.1} parent=1 // pred_check_branch
      %77 = sbr.rel (0) target = $region33
    $region32: #{tpu_custom_call.1} parent=1 // pred_region
      %79 = dma.done [#allocation6], 256
    $region33: #{tpu_custom_call.1} parent=1 // pred_fallthru
      _
    // Predicated region
    $region34: #{tpu_custom_call.1} parent=1 // pred_check
      _
    $region35: #{tpu_custom_call.1} parent=1 // pred_check_branch
      %81 = sbr.rel (0) target = $region37
    $region36: #{tpu_custom_call.1} parent=1 // pred_region
      %83 = dma.done [#allocation9], 256
    $region37: #{tpu_custom_call.1} parent=1 // pred_fallthru
      _
    %v85 = vld [vmem:[#allocation2] sm:$0xff]
    %v86 = vld [vmem:[#allocation2 + $0x8] sm:$0xff]
    %v87 = vpack.c.bf16 %v86, %v85
    %v88 = vld [vmem:[#allocation5] sm:$0xff]
    %v89 = vld [vmem:[#allocation5 + $0x8] sm:$0xff]
    %v90 = vpack.c.bf16 %v89, %v88
    %v91 = vld [vmem:[#allocation7] sm:$0xf]
    %v92 = vld [vmem:[#allocation7 + $0x4] sm:$0xf]
    %v93 = vld [vmem:[#allocation7 + $0x8] sm:$0xf]
    %v94 = vld [vmem:[#allocation7 + $0xc] sm:$0xf]
    %v95 = vld [vmem:[#allocation8] sm:$0xf]
    %v96 = vld [vmem:[#allocation8 + $0x4] sm:$0xf]
    %v97 = vld [vmem:[#allocation8 + $0x8] sm:$0xf]
    %v98 = vld [vmem:[#allocation8 + $0xc] sm:$0xf]
    %v103 = vunpack.c.l.b16 %v95
    %v104 = vunpack.c.l.b16 %v96
    %v105 = vunpack.c.l.b16 %v97
    %v106 = vunpack.c.l.b16 %v98
    %v107 = vpack.c.b16 %v104, %v103
    %v108 = vpack.c.b16 %v106, %v105
    %vm111 = vcmask 261120
    %v113 = vsel %vm111, %v90, 0
    %115 = vmatpush.bf16.msra.mxu0 0
    %116 = vmatpush.bf16.msra.mxu0 0
    %117 = vmatpush.bf16.msra.mxu0 0
    %118 = vmatpush.bf16.msra.mxu0 0
    %119 = vmatpush.bf16.msra.mxu0 0
    %120 = vmatpush.bf16.msra.mxu0 0
    %121 = vmatpush.bf16.msra.mxu0 %v108
    %122 = vmatpush.bf16.msra.mxu0 %v107
    %123 = vmatmul.bf16.gmra.mxu0 %v113
    %v124 = vpop.f32.mrf.mxu0
    %v125 = vadd.f32 0.0, %v124
    %v126 = vpop.f32.mrf.mxu0
    %v127 = vadd.f32 0.0, %v126
    %128 = vdwg.mxu0
    %v133 = vunpack.c.l.b16 %v91
    %v134 = vunpack.c.l.b16 %v92
    %v135 = vunpack.c.l.b16 %v93
    %v136 = vunpack.c.l.b16 %v94
    %v137 = vpack.c.b16 %v134, %v133
    %v138 = vpack.c.b16 %v136, %v135
    %v142 = vsel %vm111, %v87, 0
    %144 = vmatpush.bf16.msra.mxu0 0
    %145 = vmatpush.bf16.msra.mxu0 0
    %146 = vmatpush.bf16.msra.mxu0 0
    %147 = vmatpush.bf16.msra.mxu0 0
    %148 = vmatpush.bf16.msra.mxu0 0
    %149 = vmatpush.bf16.msra.mxu0 0
    %150 = vmatpush.bf16.msra.mxu0 %v138
    %151 = vmatpush.bf16.msra.mxu0 %v137
    %152 = vmatmul.bf16.gmra.mxu0 %v142
    %v153 = vpop.f32.mrf.mxu0
    %v154 = vadd.f32 %v125, %v153
    %v155 = vpop.f32.mrf.mxu0
    %v156 = vadd.f32 %v127, %v155
    %157 = vdwg.mxu0
    %v158 = vld [vmem:[%s4] sm:$0x1]
    %v160 = vperm.slane %v158, 0
    %v162 = vadd.f32 %v154, %v160
    %v163 = vadd.f32 %v156, %v160
    %164 = vst [vmem:[#allocation10] sm:$0xff] %v162
    %165 = vst [vmem:[#allocation10 + $0x8] sm:$0xff] %v163
    // Predicated region
    $region38: #{tpu_custom_call.1} parent=1 // pred_check
      _
    $region39: #{tpu_custom_call.1} parent=1 // pred_check_branch
      %167 = sbr.rel (0) target = $region41
    $region40: #{tpu_custom_call.1} parent=1 // pred_region
      %169 = vsyncadd [#allocation4], 0
      %s170 = sshll.u32 [#allocation10], 4
      %s171 = int_to_ptr.vmem [resolvable:$true] %s170
      %s172 = sshll.u32 %s5, 4
      %s173 = int_to_ptr.hbm [resolvable:$true] %s172
      %178 = dma.vmem_to_hbm [thread:$0]  %s171, 256, %s173, [#allocation4], 128, 128, 8
    $region41: #{tpu_custom_call.1} parent=1 // pred_fallthru
      _
    // Predicated region
    $region42: #{tpu_custom_call.1} parent=1 // pred_check
      _
    $region43: #{tpu_custom_call.1} parent=1 // pred_check_branch
      %180 = sbr.rel (0) target = $region45
    $region44: #{tpu_custom_call.1} parent=1 // pred_region
      %182 = dma.done [#allocation4], 256
    $region45: #{tpu_custom_call.1} parent=1 // pred_fallthru
      _
    %183 = vsyncpa [#allocation3], 1
    %184 = vsyncpa [#allocation6], 1
    %185 = vsyncpa [#allocation9], 1
    %186 = vsyncpa [#allocation4], 1

</llo_original>
